<compile_context>
chip_gen: v7x
topology: tpu7x:2x2x1
jax: 0.10.0
libtpu: 0.0.40
codegen_flags: <defaults>
</compile_context>

<pallas_src>
import jax
import jax.numpy as jnp
from jax.experimental import pallas as pl
from jax.experimental.pallas import tpu as pltpu


def _round_up(x, m):
    return ((x + m - 1) // m) * m


def _vmem_capacity_bytes():
    try:
        return int(pltpu.get_tpu_info().vmem_capacity_bytes)
    except Exception:
        return 64 * 1024 * 1024


def _is_dual_tensorcore_part():
    # v7x has 2 TensorCores per chip; v5e/v6e have 1.
    try:
        kind = jax.devices()[0].device_kind.lower()
    except Exception:
        return False
    return ("v7" in kind) or ("tpu7" in kind)


def _spatial_softmax_kernel(x_ref, o_ref):
    # x_ref/o_ref: (row_tile, H*W) in VMEM.  Full rows per block, so the
    # softmax is a single lane-axis reduction per row.  Compute in fp32.
    x = x_ref[...].astype(jnp.float32)
    m = jnp.max(x, axis=-1, keepdims=True)          # XLU reduction
    e = jnp.exp(x - m)                              # EUP
    s = jnp.sum(e, axis=-1, keepdims=True)          # XLU reduction
    # Exact reciprocal: it only acts on a (row_tile, 1) column of a memory-
    # bound kernel (approx=True buys nothing) and preserves the 1e-5 check.
    o_ref[...] = (e * pl.reciprocal(s, approx=False)).astype(o_ref.dtype)


def _softmax_rows(x2, *, tile_budget_bytes=None):
    """Row-wise softmax of a 2D array (rows, hw) along the last axis."""
    rows, hw = x2.shape
    itemsize = jnp.dtype(x2.dtype).itemsize
    # Sublane packing: 8 rows/vreg for fp32, 16 for bf16, 32 for int8/fp8.
    sub = 8 * max(1, 4 // itemsize)

    dual_core = _is_dual_tensorcore_part()

    # Per-TensorCore VMEM budget.  Clamp to 64 MiB: on v7x the capacity query
    # may report per-chip (128 MiB for 2 TCs) while each core only has 64 MiB;
    # the clamp costs nothing on v5e/v6e since tiles are row-capped anyway.
    vmem_cap = min(_vmem_capacity_bytes(), 64 * 1024 * 1024)
    vmem_limit = (3 * vmem_cap) // 4            # headroom for compiler scratch
    if tile_budget_bytes is None:
        buf_budget = vmem_limit // 2            # pipelined buffers get half
    else:
        buf_budget = int(tile_budget_bytes)     # debug/test override

    # Per-row cost: double-buffered input + output blocks + ~3 fp32 temps.
    bytes_per_row = hw * (4 * itemsize + 3 * 4)

    if sub * bytes_per_row > buf_budget:
        # Even one minimal row block does not fit (very large H*W, v7x-first):
        # lane-chunked two-pass online softmax.
        return _softmax_rows_lane_split(
            x2, sub=sub, buf_budget=buf_budget, vmem_limit=vmem_limit)

    row_cap = 512 if itemsize < 4 else 1024     # fp32 temps dominate for bf16
    row_tile = min(row_cap, buf_budget // bytes_per_row)
    row_tile = max(sub, (row_tile // sub) * sub)
    if row_tile >= rows:
        # Whole problem fits in one block (block dim == full array dim is
        # legal even when not (8,128)-aligned).
        row_tile = rows
        if dual_core and rows >= 2 * sub:
            # Split into >= 2 grid steps so dimension_semantics=("parallel",)
            # can shard across both v7x TensorCores; cdiv grid => no pad copy.
            row_tile = _round_up(pl.cdiv(rows, 2), sub)
    grid = (pl.cdiv(rows, row_tile),)

    return pl.pallas_call(
        _spatial_softmax_kernel,
        out_shape=jax.ShapeDtypeStruct((rows, hw), x2.dtype),
        grid_spec=pltpu.PrefetchScalarGridSpec(
            num_scalar_prefetch=0,
            grid=grid,
            # Lane dim = full hw: legal for any hw, reductions see only valid
            # lanes, and no HBM-side pad/slice pass is ever needed.
            in_specs=[pl.BlockSpec((row_tile, hw), lambda i: (i, 0))],
            out_specs=pl.BlockSpec((row_tile, hw), lambda i: (i, 0)),
        ),
        compiler_params=pltpu.CompilerParams(
            dimension_semantics=("parallel",),
            vmem_limit_bytes=int(vmem_limit),
        ),
    )(x2)


def _softmax_rows_lane_split(x2, *, sub, buf_budget, vmem_limit):
    """Two-pass online softmax for rows too wide to fit one block in VMEM."""
    rows, hw = x2.shape
    itemsize = jnp.dtype(x2.dtype).itemsize
    row_block = min(sub, rows)

    # Lane-chunk size: multiple of 128, sized so a (row_block, chunk) input
    # block (double-buffered) plus ~2 fp32 temps fits the budget.
    chunk = buf_budget // (max(1, row_block) * (2 * itemsize + 2 * 4))
    chunk = max(128, (chunk // 128) * 128)
    chunk = min(chunk, _round_up(hw, 128))
    n_row_blocks = pl.cdiv(rows, row_block)
    n_chunks = pl.cdiv(hw, chunk)

    # ---- pass 1: per-row running max and sum-of-exp (online softmax) -------
    def stats_kernel(x_ref, m_ref, l_ref):
        j = pl.program_id(1)

        @pl.when(j == 0)
        def _():
            m_ref[...] = jnp.full_like(m_ref, -jnp.inf)
            l_ref[...] = jnp.zeros_like(l_ref)

        x = x_ref[...].astype(jnp.float32)
        # The last lane chunk may extend past hw: mask garbage lanes to -inf
        # so they contribute exp(-inf) = 0 to the running statistics.
        col = j * chunk + jax.lax.broadcasted_iota(jnp.int32, x.shape, 1)
        x = jnp.where(col < hw, x, -jnp.inf)
        m_prev = m_ref[...]
        m_new = jnp.maximum(m_prev, jnp.max(x, axis=-1, keepdims=True))
        l_ref[...] = (l_ref[...] * jnp.exp(m_prev - m_new)
                      + jnp.sum(jnp.exp(x - m_new), axis=-1, keepdims=True))
        m_ref[...] = m_new

    m, l = pl.pallas_call(
        stats_kernel,
        out_shape=(jax.ShapeDtypeStruct((rows, 1), jnp.float32),
                   jax.ShapeDtypeStruct((rows, 1), jnp.float32)),
        grid_spec=pltpu.PrefetchScalarGridSpec(
            num_scalar_prefetch=0,
            grid=(n_row_blocks, n_chunks),
            in_specs=[pl.BlockSpec((row_block, chunk), lambda i, j: (i, j))],
            out_specs=[pl.BlockSpec((row_block, 1), lambda i, j: (i, 0)),
                       pl.BlockSpec((row_block, 1), lambda i, j: (i, 0))],
        ),
        compiler_params=pltpu.CompilerParams(
            dimension_semantics=("parallel", "arbitrary"),
            vmem_limit_bytes=int(vmem_limit),
        ),
    )(x2)

    # ---- pass 2: normalize each lane chunk with the per-row stats ----------
    def norm_kernel(x_ref, m_ref, l_ref, o_ref):
        x = x_ref[...].astype(jnp.float32)
        o_ref[...] = (jnp.exp(x - m_ref[...])
                      * pl.reciprocal(l_ref[...], approx=False)).astype(o_ref.dtype)

    return pl.pallas_call(
        norm_kernel,
        out_shape=jax.ShapeDtypeStruct((rows, hw), x2.dtype),
        grid_spec=pltpu.PrefetchScalarGridSpec(
            num_scalar_prefetch=0,
            grid=(n_row_blocks, n_chunks),
            in_specs=[pl.BlockSpec((row_block, chunk), lambda i, j: (i, j)),
                      pl.BlockSpec((row_block, 1), lambda i, j: (i, 0)),
                      pl.BlockSpec((row_block, 1), lambda i, j: (i, 0))],
            out_specs=pl.BlockSpec((row_block, chunk), lambda i, j: (i, j)),
        ),
        compiler_params=pltpu.CompilerParams(
            dimension_semantics=("parallel", "parallel"),
            vmem_limit_bytes=int(vmem_limit),
        ),
    )(x2, m, l)


def flat_softmax(x, *, _tile_budget_bytes=None):
    """Spatial softmax over (H, W) for each (B, C) channel. x: [B, C, H, W]."""
    B, C, H, W = x.shape
    x2 = x.reshape(B * C, H * W)
    out2 = _softmax_rows(x2, tile_budget_bytes=_tile_budget_bytes)
    return out2.reshape(B, C, H, W)


def _reference(x):
    B, C, H, W = x.shape
    x2 = x.reshape(B, C, H * W).astype(jnp.float32)
    y = jax.nn.softmax(x2, axis=-1)
    return y.reshape(B, C, H, W).astype(x.dtype)


if __name__ == "__main__":
    key = jax.random.PRNGKey(0)

    # Primary shape (matches the module's intended use).
    B, C, H, W = 2, 4, 16, 16
    x = jax.random.normal(key, (B, C, H, W), dtype=jnp.float32)
    out = jax.block_until_ready(flat_softmax(x))
    ref = _reference(x)
    assert out.shape == (B, C, H, W)
    assert jnp.allclose(out, ref, atol=1e-5, rtol=1e-5), "mismatch vs reference"
    assert jnp.allclose(out.reshape(B, C, -1).sum(-1), 1.0, atol=1e-4)

    # Odd shape: rows=6, hw=49 (neither (8,128)-aligned).  Exercises the
    # full-dim block path with zero HBM-side padding or slicing.
    x_odd = jax.random.normal(jax.random.PRNGKey(0), (2, 3, 7, 7),
                              dtype=jnp.float32)
    out_odd = jax.block_until_ready(flat_softmax(x_odd))
    assert jnp.allclose(out_odd, _reference(x_odd), atol=1e-5, rtol=1e-5)
    assert jnp.allclose(out_odd.reshape(2, 3, -1).sum(-1), 1.0, atol=1e-4)

    # Force a small tile budget so the main path uses a partial last row block
    # (rows=20 with row_tile=8) -- validates Pallas's masked store of the
    # partial block without needing a huge tensor.
    x_part = jax.random.normal(jax.random.PRNGKey(0), (4, 5, 16, 16),
                               dtype=jnp.float32)
    out_part = jax.block_until_ready(
        flat_softmax(x_part, _tile_budget_bytes=64 * 1024))
    assert jnp.allclose(out_part, _reference(x_part), atol=1e-5, rtol=1e-5)

    # Force the large-H*W lane-split (two-pass online-softmax) fallback with a
    # tiny tile budget so that code path is validated even at small shapes.
    x_ls = jax.random.normal(jax.random.PRNGKey(0), (1, 2, 24, 40),
                             dtype=jnp.float32)
    out_ls = jax.block_until_ready(
        flat_softmax(x_ls, _tile_budget_bytes=16 * 1024))
    assert jnp.allclose(out_ls, _reference(x_ls), atol=1e-5, rtol=1e-5)
    assert jnp.allclose(out_ls.reshape(1, 2, -1).sum(-1), 1.0, atol=1e-4)

    print("KERNEL_OK")
</pallas_src>

<mosaic_0001>
module attributes {stable_mosaic.version = 11 : i64} {
  func.func @_spatial_softmax_kernel(%arg0: i32, %arg1: memref<8x256xf32, #tpu.memory_space<vmem>>, %arg2: memref<8x256xf32, #tpu.memory_space<vmem>>) attributes {dimension_semantics = [#tpu.dimension_semantics<parallel>], iteration_bounds = array<i64: 1>, scalar_prefetch = 0 : i64, scratch_operands = 0 : i64, tpu.core_type = #tpu.core_type<tc>, window_params = [{transform_indices = @transform_0, window_bounds = array<i64: 8, 256>}, {transform_indices = @transform_1, window_bounds = array<i64: 8, 256>}]} {
    %c0 = arith.constant 0 : index
    %c0_0 = arith.constant 0 : index
    %0 = vector.load %arg1[%c0, %c0_0] : memref<8x256xf32, #tpu.memory_space<vmem>>, vector<8x256xf32>
    %cst = arith.constant dense<0xFF800000> : vector<8xf32>
    %1 = vector.multi_reduction <maximumf>, %0, %cst [1] : vector<8x256xf32> to vector<8xf32>
    %2 = vector.shape_cast %1 : vector<8xf32> to vector<8x1xf32>
    %3 = vector.broadcast %2 : vector<8x1xf32> to vector<8x256xf32>
    %4 = arith.subf %0, %3 : vector<8x256xf32>
    %5 = math.exp %4 : vector<8x256xf32>
    %cst_1 = arith.constant dense<0.000000e+00> : vector<8xf32>
    %6 = vector.multi_reduction <add>, %5, %cst_1 [1] : vector<8x256xf32> to vector<8xf32>
    %7 = vector.shape_cast %6 : vector<8xf32> to vector<8x1xf32>
    %8 = tpu.reciprocal %7 : vector<8x1xf32> -> vector<8x1xf32>
    %9 = vector.broadcast %8 : vector<8x1xf32> to vector<8x256xf32>
    %10 = arith.mulf %5, %9 : vector<8x256xf32>
    %c0_2 = arith.constant 0 : index
    %c0_3 = arith.constant 0 : index
    %11 = vector.load %arg2[%c0_2, %c0_3] : memref<8x256xf32, #tpu.memory_space<vmem>>, vector<8x256xf32>
    tpu.vector_store %arg2[%c0_2, %c0_3], %10 {strides = array<i32>} : memref<8x256xf32, #tpu.memory_space<vmem>>, vector<8x256xf32>,
    return
  }
  func.func @transform_0(%arg0: i32) -> (i32, i32) {
    %c0_i32 = arith.constant 0 : i32
    %c0_i32_0 = arith.constant 0 : i32
    return %arg0, %c0_i32 : i32, i32
  }
  func.func @transform_1(%arg0: i32) -> (i32, i32) {
    %c0_i32 = arith.constant 0 : i32
    %c0_i32_0 = arith.constant 0 : i32
    return %arg0, %c0_i32 : i32, i32
  }
}

</mosaic_0001>

<llo_original>
// kernel: tpu_custom_call.1
$region0: #{tpu_custom_call.1}
  #allocation0 [shape = 'u32[]', space=smem, size = 0x4, offset = 0x4, fixed_abs, tag = 'smem constant byte address 0x4 - core index']
  #allocation1 [shape = 'u32[144,128]{1,0:T(1,128)}', space=vmem, size = 0x12000, scoped, tag = 'internal scratch']
  %s0 = inlined_call_operand.hbm [shape: f32[8,256], index: 0, kind: input, shape index: {}]
  %s1 = inlined_call_operand.hbm [shape: f32[8,256], index: 1, kind: output, shape index: {}]
  %s2 = sld [smem:[#allocation0]]
  $region18: #{tpu_custom_call.1} parent=0
    _
  %s4 = ssub.s32 1, %s2
  %s5 = scalar_select 0, %s4, %s2
  $region1: #{tpu_custom_call.1} parent=0
    #allocation2 [shape = 'u8[8192]{0}', space=vmem, size = 0x2000, scoped, tag = 'input window, operand 0, single buffered']
    #allocation3 [shape = 's32[1]{0}', space=sflag, size = 0x4, scoped, tag = 'scoped memory for tpu_custom_call.1']
    #allocation4 [shape = 's32[1]{0}', space=sflag, size = 0x4, scoped, tag = 'scoped memory for tpu_custom_call.1']
    #allocation5 [shape = 'u8[8192]{0}', space=vmem, size = 0x2000, scoped, tag = 'output window, operand 0, single buffered']
    %6 = vsyncpa [#allocation3], 0
    %7 = vsyncpa [#allocation4], 0
    // Predicated region
    $region2: #{tpu_custom_call.1} parent=1 // pred_check
      _
    $region3: #{tpu_custom_call.1} parent=1 // pred_check_branch
      %9 = sbr.rel (0) target = $region5
    $region4: #{tpu_custom_call.1} parent=1 // pred_region
      %s11 = ssub.s32 256, 256
      %12 = vsyncadd [#allocation3], %s11
      %s14 = sshll.u32 [#allocation2], 4
      %s15 = int_to_ptr.vmem [resolvable:$true] %s14
      %17 = dma.hbm_to_vmem [thread:$0]  %s0, 256, %s15, [#allocation3]
    $region5: #{tpu_custom_call.1} parent=1 // pred_fallthru
      _
    // Predicated region
    $region6: #{tpu_custom_call.1} parent=1 // pred_check
      _
    $region7: #{tpu_custom_call.1} parent=1 // pred_check_branch
      %19 = sbr.rel (0) target = $region9
    $region8: #{tpu_custom_call.1} parent=1 // pred_region
      %20 = dma.done [#allocation3], 256
    $region9: #{tpu_custom_call.1} parent=1 // pred_fallthru
      _
    %v21 = vld [vmem:[#allocation2] sm:$0xff]
    %v22 = vld [vmem:[#allocation2 + $0x8] sm:$0xff]
    %v23 = vmax.f32 %v21, %v22
    %24 = vmax.xlane.f32.xlu0 %v23
    %v25 = vpop.xlane.xlu0 %24
    %v26 = vsub.f32 %v21, %v25
    %v27 = vsub.f32 %v22, %v25
    %v28 = vmul.f32 %v26, 1.442695
    %v29 = vpow.pop %v28
    %v30 = vmul.f32 %v27, 1.442695
    %v31 = vpow.pop %v30
    %v32 = vadd.f32 %v29, %v31
    %33 = vadd.xlane.f32.xlu0 %v32
    %v34 = vpop.xlane.xlu0 %33
    %v35 = vrcp.pop %v34
    %v36 = vmul.f32 %v29, %v35
    %v37 = vmul.f32 %v31, %v35
    %38 = vst [vmem:[#allocation5] sm:$0xff] %v36
    %39 = vst [vmem:[#allocation5 + $0x8] sm:$0xff] %v37
    // Predicated region
    $region10: #{tpu_custom_call.1} parent=1 // pred_check
      _
    $region11: #{tpu_custom_call.1} parent=1 // pred_check_branch
      %41 = sbr.rel (0) target = $region13
    $region12: #{tpu_custom_call.1} parent=1 // pred_region
      %s43 = ssub.s32 256, 256
      %44 = vsyncadd [#allocation4], %s43
      %s46 = sshll.u32 [#allocation5], 4
      %s47 = int_to_ptr.vmem [resolvable:$true] %s46
      %49 = dma.vmem_to_hbm [thread:$0]  %s47, 256, %s1, [#allocation4]
    $region13: #{tpu_custom_call.1} parent=1 // pred_fallthru
      _
    // Predicated region
    $region14: #{tpu_custom_call.1} parent=1 // pred_check
      _
    $region15: #{tpu_custom_call.1} parent=1 // pred_check_branch
      %51 = sbr.rel (0) target = $region17
    $region16: #{tpu_custom_call.1} parent=1 // pred_region
      %52 = dma.done [#allocation4], 256
    $region17: #{tpu_custom_call.1} parent=1 // pred_fallthru
      _
    %53 = vsyncpa [#allocation3], 1
    %54 = vsyncpa [#allocation4], 1

</llo_original>
